<compile_context>
chip_gen: v7x
topology: tpu7x:2x2x1
jax: 0.10.0
libtpu: 0.0.40
codegen_flags: <defaults>
</compile_context>

<pallas_src>
import functools

import numpy as np

import jax
import jax.numpy as jnp
from jax.experimental import pallas as pl
from jax.experimental.pallas import tpu as pltpu


# --------------------------------------------------------------------------- #
# Small host-side helpers                                                      #
# --------------------------------------------------------------------------- #
def _round_up(x, m):
    return ((x + m - 1) // m) * m


def _round_down(x, m):
    return (x // m) * m


def _vmem_capacity_bytes():
    """Per-core VMEM capacity (generation-aware); conservative fallback = 64 MiB (v7x)."""
    try:
        cap = int(pltpu.get_tpu_info().vmem_capacity_bytes)
        if cap > 0:
            return cap
    except Exception:
        pass
    return 64 * 1024 * 1024


# --------------------------------------------------------------------------- #
# Interpolation weight matrices (PyTorch-compatible), built on the HOST with   #
# NumPy at trace time -> become compile-time constants.                        #
# --------------------------------------------------------------------------- #
def _interp_matrix_1d(in_size, out_size, mode, align_corners):
    """A[out_size, in_size] with  out = A @ in  along one spatial axis."""
    out_idx = np.arange(out_size, dtype=np.float32)
    a = np.zeros((out_size, in_size), dtype=np.float32)
    if mode == "nearest":
        scale = np.float32(in_size / out_size)
        src = np.minimum(np.floor(out_idx * scale).astype(np.int64), in_size - 1)
        a[np.arange(out_size), src] = 1.0
        return a
    if mode != "bilinear":
        # TODO(synk): bicubic / area interpolation modes are not implemented.
        raise NotImplementedError(f"mode={mode!r} not implemented")
    if align_corners:
        scale = np.float32((in_size - 1) / (out_size - 1)) if out_size > 1 else np.float32(0.0)
        src = out_idx * scale
    else:
        scale = np.float32(in_size / out_size)
        src = np.maximum((out_idx + 0.5) * scale - 0.5, 0.0)  # PyTorch clamps src >= 0
    i0 = np.clip(np.floor(src).astype(np.int64), 0, in_size - 1)
    i1 = np.minimum(i0 + 1, in_size - 1)
    frac = (src - i0).astype(np.float32)
    rows = np.arange(out_size)
    np.add.at(a, (rows, i0), 1.0 - frac)
    np.add.at(a, (rows, i1), frac)
    return a


# --------------------------------------------------------------------------- #
# Pallas kernels                                                               #
# --------------------------------------------------------------------------- #
def _kron_matmul_kernel(x_ref, k_ref, o_ref):
    # x_ref: [TB, H*W], k_ref: [H*W, HWout_padded], o_ref: [TB, HWout_padded]
    o_ref[...] = jnp.dot(x_ref[...], k_ref[...],
                         preferred_element_type=jnp.float32).astype(o_ref.dtype)


def _separable_kernel(x_ref, ah_ref, awt_ref, o_ref):
    # x_ref: [1, H, W], ah_ref: [Hout, H], awt_ref: [W, Wout], o_ref: [1, Hout, Wout]
    t = jnp.dot(ah_ref[...], x_ref[0], preferred_element_type=jnp.float32)   # [Hout, W]
    o_ref[0] = jnp.dot(t, awt_ref[...],
                       preferred_element_type=jnp.float32).astype(o_ref.dtype)


# --------------------------------------------------------------------------- #
# Separable two-pass fallback (large spatial sizes / kron does not fit VMEM)   #
# --------------------------------------------------------------------------- #
def _separable_call(x, a_h, a_w, size, w_dtype, vmem_budget, vmem_cap):
    T_, B_, C_, H, W = x.shape
    Hout, Wout = size
    MC = T_ * B_ * C_
    itemsize = jnp.dtype(x.dtype).itemsize
    w_itemsize = jnp.dtype(w_dtype).itemsize

    per_image = (2 * itemsize * (H * W + Hout * Wout)      # double-buffered in/out tiles
                 + 4 * Hout * W                            # f32 intermediate
                 + w_itemsize * (Hout * H + W * Wout))     # resident weights (single buffer)
    if per_image + (4 << 20) > vmem_budget:
        # TODO(synk): spatially tile a single image inside the separable kernel.
        raise NotImplementedError("single image does not fit VMEM")

    ah = jnp.asarray(a_h, dtype=w_dtype)       # [Hout, H]
    awt = jnp.asarray(a_w.T, dtype=w_dtype)    # [W, Wout]
    x3 = x.reshape(MC, H, W)

    vmem_limit = int(min(max(per_image + (2 << 20), 16 << 20), vmem_cap))
    cost = pl.CostEstimate(
        flops=2 * MC * (Hout * H * W + Hout * W * Wout),
        transcendentals=0,
        bytes_accessed=itemsize * MC * (H * W + Hout * Wout)
        + w_itemsize * (Hout * H + W * Wout),
    )

    out3 = pl.pallas_call(
        _separable_kernel,
        grid=(MC,),
        in_specs=[
            pl.BlockSpec((1, H, W), lambda i: (i, 0, 0)),
            pl.BlockSpec((Hout, H), lambda i: (0, 0), pipeline_mode=pl.Buffered(1)),
            pl.BlockSpec((W, Wout), lambda i: (0, 0), pipeline_mode=pl.Buffered(1)),
        ],
        out_specs=pl.BlockSpec((1, Hout, Wout), lambda i: (i, 0, 0)),
        out_shape=jax.ShapeDtypeStruct((MC, Hout, Wout), x.dtype),
        compiler_params=pltpu.CompilerParams(
            dimension_semantics=("parallel",),
            vmem_limit_bytes=vmem_limit,
        ),
        cost_estimate=cost,
    )(x3, ah, awt)

    return out3.reshape(T_, B_, C_, Hout, Wout)


# --------------------------------------------------------------------------- #
# Public entry point (matches BasicInterpolate.forward)                        #
# --------------------------------------------------------------------------- #
@functools.partial(jax.jit,
                   static_argnames=("size", "mode", "align_corners", "force_path"))
def basic_interpolate(x, size, mode="bilinear", align_corners=False, force_path="auto"):
    """x: [T, B, C, H, W] -> [T, B, C, Hout, Wout]."""
    T_, B_, C_, H, W = x.shape
    Hout, Wout = size
    MC = T_ * B_ * C_
    hw_in, hw_out = H * W, Hout * Wout
    itemsize = jnp.dtype(x.dtype).itemsize
    # Match MXU operand dtypes only when x itself is bf16 (keeps f32 accuracy otherwise).
    w_dtype = jnp.bfloat16 if x.dtype == jnp.bfloat16 else jnp.float32
    w_itemsize = jnp.dtype(w_dtype).itemsize

    # Host-side (trace-time) per-axis interpolation matrices -> compile-time constants.
    a_h = _interp_matrix_1d(H, Hout, mode, align_corners)    # [Hout, H]
    a_w = _interp_matrix_1d(W, Wout, mode, align_corners)    # [Wout, W]

    vmem_cap = _vmem_capacity_bytes()
    vmem_budget = max(24 << 20, (vmem_cap * 3) // 4)

    # ---- fused-kron path sizing -------------------------------------------
    hw_out_p = _round_up(hw_out, 128)                  # lane-dense output (unmasked vst)
    weight_bytes = hw_in * hw_out_p * w_itemsize       # single-buffered resident weight
    sub = 16 if itemsize == 2 else 8                   # sublane granularity
    row_bytes = 2 * (hw_in * itemsize + hw_out_p * itemsize)  # double-buffered in/out rows
    headroom = 2 << 20
    tb_budget = max(0, (vmem_budget - weight_bytes - headroom) // row_bytes)
    kron_ok = (weight_bytes <= vmem_cap // 4) and (tb_budget >= sub)

    if force_path == "separable" or (force_path == "auto" and not kron_ok):
        return _separable_call(x, a_h, a_w, size, w_dtype, vmem_budget, vmem_cap)

    # Fused 2-D weight: K = kron(Ah^T, Aw^T), zero-padded to a lane-dense column count.
    k_np = np.kron(a_h.T, a_w.T)                               # [H*W, Hout*Wout]
    if hw_out_p != hw_out:
        k_np = np.pad(k_np, ((0, 0), (0, hw_out_p - hw_out)))
    k_mat = jnp.asarray(k_np, dtype=w_dtype)

    # Free (no-copy) reshape; no host transposes.
    x2 = x.reshape(MC, hw_in)

    # Row-tile: fill the VMEM budget, but keep >= 2 grid steps so both v7x TCs get work.
    two_step_cap = max(sub, _round_up(pl.cdiv(MC, 2), sub))
    tb = max(sub, min(_round_down(int(tb_budget), sub), two_step_cap))
    grid = (pl.cdiv(MC, tb),)

    # Real footprint; never clamp below it (tb already sized to fit the budget).
    est = weight_bytes + tb * row_bytes + (2 << 20)
    vmem_limit = int(min(max(est, 16 << 20), vmem_cap))

    cost = pl.CostEstimate(
        flops=2 * MC * hw_in * hw_out_p,
        transcendentals=0,
        bytes_accessed=itemsize * (MC * hw_in + MC * hw_out_p)
        + w_itemsize * hw_in * hw_out_p,
    )

    out2 = pl.pallas_call(
        _kron_matmul_kernel,
        grid=grid,
        in_specs=[
            pl.BlockSpec((tb, hw_in), lambda i: (i, 0)),            # streamed input rows
            pl.BlockSpec((hw_in, hw_out_p), lambda i: (0, 0),       # weight: resident,
                         pipeline_mode=pl.Buffered(1)),             # single-buffered
        ],
        out_specs=pl.BlockSpec((tb, hw_out_p), lambda i: (i, 0)),
        out_shape=jax.ShapeDtypeStruct((MC, hw_out_p), x.dtype),
        compiler_params=pltpu.CompilerParams(
            dimension_semantics=("parallel",),                      # megacore-shardable
            vmem_limit_bytes=vmem_limit,
        ),
        cost_estimate=cost,
    )(x2, k_mat)

    if hw_out_p != hw_out:
        out2 = out2[:, :hw_out]
    return out2.reshape(T_, B_, C_, Hout, Wout)


# --------------------------------------------------------------------------- #
# Pure-JAX reference mirroring PyTorch F.interpolate (for verification).       #
# --------------------------------------------------------------------------- #
def _src_coords(in_size, out_size, align_corners):
    out_idx = jnp.arange(out_size, dtype=jnp.float32)
    if align_corners:
        scale = (in_size - 1) / (out_size - 1) if out_size > 1 else 0.0
        src = out_idx * scale
    else:
        scale = in_size / out_size
        src = jnp.maximum((out_idx + 0.5) * scale - 0.5, 0.0)
    i0 = jnp.clip(jnp.floor(src).astype(jnp.int32), 0, in_size - 1)
    i1 = jnp.minimum(i0 + 1, in_size - 1)
    frac = src - i0.astype(jnp.float32)
    return i0, i1, frac


def interpolate_reference(x, size, mode="bilinear", align_corners=False):
    T_, B_, C_, H, W = x.shape
    Hout, Wout = size
    xf = x.reshape(T_ * B_, C_, H, W).astype(jnp.float32)
    if mode == "nearest":
        ys = jnp.minimum(jnp.floor(jnp.arange(Hout, dtype=jnp.float32) * (H / Hout)
                                   ).astype(jnp.int32), H - 1)
        xs = jnp.minimum(jnp.floor(jnp.arange(Wout, dtype=jnp.float32) * (W / Wout)
                                   ).astype(jnp.int32), W - 1)
        y = xf[:, :, ys, :][:, :, :, xs]
    else:
        y0, y1, ly = _src_coords(H, Hout, align_corners)
        x0, x1, lx = _src_coords(W, Wout, align_corners)
        top, bot = xf[:, :, y0, :], xf[:, :, y1, :]
        row = top * (1.0 - ly)[None, None, :, None] + bot * ly[None, None, :, None]
        left, right = row[:, :, :, x0], row[:, :, :, x1]
        y = left * (1.0 - lx)[None, None, None, :] + right * lx[None, None, None, :]
    return y.reshape(T_, B_, C_, Hout, Wout).astype(x.dtype)


if __name__ == "__main__":
    # Small shapes consistent with the module's forward: [T, B, C, H, W].
    T_, B_, C_, H, W = 2, 2, 16, 16, 16
    key = jax.random.PRNGKey(0)
    x = jax.random.normal(key, (T_, B_, C_, H, W), dtype=jnp.float32)

    # (size, mode, align_corners, path, dtype, tolerance)
    configs = [
        ((32, 32), "bilinear", False, "auto", jnp.float32, 1e-4),
        ((32, 32), "bilinear", True,  "auto", jnp.float32, 1e-4),
        ((32, 32), "nearest",  False, "auto", jnp.float32, 1e-4),
        ((24, 24), "bilinear", False, "auto", jnp.float32, 1e-4),       # padded-lane path
        ((32, 32), "bilinear", False, "separable", jnp.float32, 1e-4),  # two-pass fallback
        ((32, 32), "bilinear", False, "auto", jnp.bfloat16, 5e-2),      # bf16 MXU path
    ]
    for size, mode, ac, path, dtype, tol in configs:
        xi = x.astype(dtype)
        out = basic_interpolate(xi, size, mode=mode, align_corners=ac, force_path=path)
        out = jax.block_until_ready(out)
        ref = interpolate_reference(xi, size, mode=mode, align_corners=ac)
        assert out.shape == (T_, B_, C_, *size), out.shape
        err = float(jnp.max(jnp.abs(out.astype(jnp.float32) - ref.astype(jnp.float32))))
        assert err < tol, (size, mode, ac, path, str(dtype), err)

    print("KERNEL_OK")
</pallas_src>

<mosaic_0001>
module attributes {stable_mosaic.version = 11 : i64} {
  func.func @_kron_matmul_kernel(%arg0: i32, %arg1: memref<32x256xf32, #tpu.memory_space<vmem>>, %arg2: memref<256x1024xf32, #tpu.memory_space<vmem>>, %arg3: memref<32x1024xf32, #tpu.memory_space<vmem>>) attributes {dimension_semantics = [#tpu.dimension_semantics<parallel>], iteration_bounds = array<i64: 2>, scalar_prefetch = 0 : i64, scratch_operands = 0 : i64, tpu.core_type = #tpu.core_type<tc>, window_params = [{transform_indices = @transform_0, window_bounds = array<i64: 32, 256>}, {pipeline_mode = #tpu.pipeline_mode<synchronous>, transform_indices = @transform_1, window_bounds = array<i64: 256, 1024>}, {transform_indices = @transform_2, window_bounds = array<i64: 32, 1024>}]} {
    %c0 = arith.constant 0 : index
    %c0_0 = arith.constant 0 : index
    %0 = vector.load %arg1[%c0, %c0_0] : memref<32x256xf32, #tpu.memory_space<vmem>>, vector<32x256xf32>
    %c0_1 = arith.constant 0 : index
    %c0_2 = arith.constant 0 : index
    %1 = vector.load %arg2[%c0_1, %c0_2] : memref<256x1024xf32, #tpu.memory_space<vmem>>, vector<256x1024xf32>
    %cst = arith.constant dense<0.000000e+00> : vector<32x1024xf32>
    %2 = tpu.matmul %0, %1, %cst {dimension_numbers = #tpu.dot_dimension_numbers<[1], [0], [0], [1], [0, 0, 1, 1], [], []>} : vector<32x256xf32>, vector<256x1024xf32>, vector<32x1024xf32> -> vector<32x1024xf32>
    %c0_3 = arith.constant 0 : index
    %c0_4 = arith.constant 0 : index
    %3 = vector.load %arg3[%c0_3, %c0_4] : memref<32x1024xf32, #tpu.memory_space<vmem>>, vector<32x1024xf32>
    tpu.vector_store %arg3[%c0_3, %c0_4], %2 {strides = array<i32>} : memref<32x1024xf32, #tpu.memory_space<vmem>>, vector<32x1024xf32>,
    return
  }
  func.func @transform_0(%arg0: i32) -> (i32, i32) {
    %c0_i32 = arith.constant 0 : i32
    %c0_i32_0 = arith.constant 0 : i32
    return %arg0, %c0_i32 : i32, i32
  }
  func.func @transform_1(%arg0: i32) -> (i32, i32) {
    %c0_i32 = arith.constant 0 : i32
    %c0_i32_0 = arith.constant 0 : i32
    %c0_i32_1 = arith.constant 0 : i32
    return %c0_i32, %c0_i32_0 : i32, i32
  }
  func.func @transform_2(%arg0: i32) -> (i32, i32) {
    %c0_i32 = arith.constant 0 : i32
    %c0_i32_0 = arith.constant 0 : i32
    return %arg0, %c0_i32 : i32, i32
  }
}

</mosaic_0001>

<llo_original>
// kernel: basic_interpolate.1
$region0: #{basic_interpolate.1}
  #allocation0 [shape = 'u32[]', space=smem, size = 0x4, offset = 0x4, fixed_abs, tag = 'smem constant byte address 0x4 - core index']
  #allocation1 [shape = 'u32[144,128]{1,0:T(1,128)}', space=vmem, size = 0x12000, scoped, tag = 'internal scratch']
  %s0 = inlined_call_operand.vmem [shape: f32[64,256], index: 0, kind: input, shape index: {}]
  %s1 = inlined_call_operand.hbm [shape: f32[256,1024], index: 1, kind: input, shape index: {}]
  %s2 = inlined_call_operand.vmem [shape: f32[64,1024], index: 2, kind: output, shape index: {}]
  %s3 = sld [smem:[#allocation0]]
  $region45: #{basic_interpolate.1} parent=0
    _
  %s5 = ssub.s32 1, %s3
  %s6 = scalar_select 0, %s5, %s3
  $region1: #{basic_interpolate.1} parent=0
    #allocation2 [shape = 'u8[1048576]{0}', space=vmem, size = 0x100000, scoped, tag = 'input window, operand 1, single buffered']
    #allocation3 [shape = 's32[2]{0}', space=sflag, size = 0x8, scoped, tag = 'scoped memory for basic_interpolate.1']
    %7 = vsyncpa [#allocation3], 0
    loop: start=0, step=1, limit=4
    $region2: #{basic_interpolate.1} parent=1 // loop_pre_header
      _
    $region3: #{basic_interpolate.1} parent=1 // loop_header
      %s9 = sphi 0, %s13
      %p10 = scmp.ge.s32.totalorder %s9, 4
      %s19 = sphi 0, %s21
      %s22 = sphi 0, %s19
      %s23 = sphi 0, %s22
      %s39 = sphi 0, %s23
      %s43 = sphi 0, %s43
      %s45 = sphi 0, %s43
      %s46 = sphi 0, %s45
      %s60 = sphi 0, %s46
      %s66 = sphi 0, %s68
      %s69 = sphi 0, %s66
      %s70 = sphi 0, %s69
      %s86 = sphi 0, %s70
    $region4: #{basic_interpolate.1} parent=1 // loop_header_branch
      %12 = sbr.rel (%p10) target = $region8
    $region5: #{basic_interpolate.1} parent=1 // loop_body
      %s14 = ssub.s32 %s9, 1
      %s15 = ssub.s32 %s9, 2
      %s16 = sadd.s32 %s9, 1
      %s17 = ssub.s32 %s9, %s16
      %p18 = scmp.eq.s32.totalorder %s17, 0
      %s20 = sadd.s32 %s19, 1
      %s21 = scalar_select %p18, %s19, %s20
      %p24 = pneg %p18
      %p25 = scmp.eq.s32.totalorder %s9, 1
      %p26 = por %p24, %p25
      %p27 = scmp.ne.s32.totalorder %s19, %s22
      %p28 = scmp.eq.s32.totalorder %s9, 0
      %p29 = por %p27, %p28
      %p30 = scmp.ne.s32.totalorder %s19, %s22
      %p31 = scmp.eq.s32.totalorder %s14, 1
      %p32 = por %p30, %p31
      %p33 = scmp.ne.s32.totalorder %s22, %s23
      %p34 = scmp.eq.s32.totalorder %s14, 0
      %p35 = por %p33, %p34
      %p36 = scmp.ne.s32.totalorder %s22, %s23
      %p37 = scmp.eq.s32.totalorder %s15, 1
      %p38 = por %p36, %p37
      %p40 = scmp.ne.s32.totalorder %s23, %s39
      %p41 = scmp.eq.s32.totalorder %s15, 0
      %p42 = por %p40, %p41
      %s44 = sadd.s32 %s43, 1
      %p47 = scmp.eq.s32.totalorder %s9, 1
      %p48 = scmp.ne.s32.totalorder %s43, %s45
      %p49 = scmp.eq.s32.totalorder %s9, 0
      %p50 = por %p48, %p49
      %p51 = scmp.ne.s32.totalorder %s43, %s45
      %p52 = scmp.eq.s32.totalorder %s14, 1
      %p53 = por %p51, %p52
      %p54 = scmp.ne.s32.totalorder %s45, %s46
      %p55 = scmp.eq.s32.totalorder %s14, 0
      %p56 = por %p54, %p55
      %p57 = scmp.ne.s32.totalorder %s45, %s46
      %p58 = scmp.eq.s32.totalorder %s15, 1
      %p59 = por %p57, %p58
      %p61 = scmp.ne.s32.totalorder %s46, %s60
      %p62 = scmp.eq.s32.totalorder %s15, 0
      %p63 = por %p61, %p62
      %s64 = ssub.s32 %s9, %s16
      %p65 = scmp.eq.s32.totalorder %s64, 0
      %s67 = sadd.s32 %s66, 1
      %s68 = scalar_select %p65, %s66, %s67
      %p71 = pneg %p65
      %p72 = scmp.eq.s32.totalorder %s9, 1
      %p73 = por %p71, %p72
      %p74 = scmp.ne.s32.totalorder %s66, %s69
      %p75 = scmp.eq.s32.totalorder %s9, 0
      %p76 = por %p74, %p75
      %p77 = scmp.ne.s32.totalorder %s66, %s69
      %p78 = scmp.eq.s32.totalorder %s14, 1
      %p79 = por %p77, %p78
      %p80 = scmp.ne.s32.totalorder %s69, %s70
      %p81 = scmp.eq.s32.totalorder %s14, 0
      %p82 = por %p80, %p81
      %p83 = scmp.ne.s32.totalorder %s69, %s70
      %p84 = scmp.eq.s32.totalorder %s15, 1
      %p85 = por %p83, %p84
      %p87 = scmp.ne.s32.totalorder %s70, %s86
      %p88 = scmp.eq.s32.totalorder %s15, 0
      %p89 = por %p87, %p88
      %p90 = scmp.le.s32.totalorder 1, %s9
      %p91 = scmp.lt.s32.totalorder %s9, 3
      %p92 = pnand %p90, %p91
      %p93 = pneg %p92
      // Predicated region
      $region9: #{basic_interpolate.1} parent=5 // pred_check
        _
      $region10: #{basic_interpolate.1} parent=5 // pred_check_branch
        %95 = sbr.rel (%p92) target = $region12
      $region11: #{basic_interpolate.1} parent=5 // pred_region
        %s96 = ssub.s32 %s9, 1
        // Predicated region
        $region13: #{basic_interpolate.1} parent=11 // pred_check
          %p97 = pneg %p56
        $region14: #{basic_interpolate.1} parent=11 // pred_check_branch
          %99 = sbr.rel (%p97) target = $region16
        $region15: #{basic_interpolate.1} parent=11 // pred_region
          %s101 = ssub.s32 32768, 32768
          %102 = vsyncadd [#allocation3], %s101
          %s103 = sshll.u32 [#allocation2], 4
          %s104 = int_to_ptr.vmem [resolvable:$true] %s103
          %109 = dma.hbm_to_vmem [thread:$0]  %s1, 32768, %s104, [#allocation3], 1024, 1024, 64
        $region16: #{basic_interpolate.1} parent=11 // pred_fallthru
          _
      $region12: #{basic_interpolate.1} parent=5 // pred_fallthru
        _
      %p110 = scmp.lt.s32.totalorder %s9, 2
      // Predicated region
      $region17: #{basic_interpolate.1} parent=5 // pred_check
        %p111 = pneg %p110
      $region18: #{basic_interpolate.1} parent=5 // pred_check_branch
        %113 = sbr.rel (%p111) target = $region20
      $region19: #{basic_interpolate.1} parent=5 // pred_region
        // Predicated region
        $region21: #{basic_interpolate.1} parent=19 // pred_check
          %p114 = pneg %p29
        $region22: #{basic_interpolate.1} parent=19 // pred_check_branch
          %116 = sbr.rel (%p114) target = $region24
        $region23: #{basic_interpolate.1} parent=19 // pred_region
          %s117 = smul.u32 4, %s9
          %p118 = scmp.lt.s32.totalorder %s117, 7
          %s119 = scalar_select %p118, %s117, 7
          %s120 = smul.addr %s119, 2
          %s121 = smul.addr %s120, 8
          %s122 = scalar_lea.vmem %s0, %s121
          %s123 = smul.u32 4, %s9
        $region24: #{basic_interpolate.1} parent=19 // pred_fallthru
          _
      $region20: #{basic_interpolate.1} parent=5 // pred_fallthru
        _
      %p124 = scmp.le.s32.totalorder 1, %s9
      %p125 = scmp.lt.s32.totalorder %s9, 3
      %p126 = pnand %p124, %p125
      %p127 = pneg %p126
      // Predicated region
      $region25: #{basic_interpolate.1} parent=5 // pred_check
        _
      $region26: #{basic_interpolate.1} parent=5 // pred_check_branch
        %129 = sbr.rel (%p126) target = $region28
      $region27: #{basic_interpolate.1} parent=5 // pred_region
        %s130 = ssub.s32 %s9, 1
        // Predicated region
        $region29: #{basic_interpolate.1} parent=27 // pred_check
          %p131 = pneg %p56
        $region30: #{basic_interpolate.1} parent=27 // pred_check_branch
          %133 = sbr.rel (%p131) target = $region32
        $region31: #{basic_interpolate.1} parent=27 // pred_region
          %134 = dma.done [#allocation3], 32768
        $region32: #{basic_interpolate.1} parent=27 // pred_fallthru
          _
        %s135 = smul.u32 4, %s14
        %p136 = scmp.lt.s32.totalorder %s135, 7
        %s137 = scalar_select %p136, %s135, 7
        %s138 = smul.addr %s137, 2
        %s139 = smul.addr %s138, 8
        %s140 = scalar_lea.vmem %s0, %s139
        %p141 = pneg %p35
        %p142 = pneg %p32
        %p143 = pneg %p56
        %p144 = pneg %p53
        %p145 = pneg %p82
        %p146 = pneg %p79
        %s147 = smul.u32 4, %s14
        %p148 = scmp.lt.s32.totalorder %s147, 7
        %s149 = scalar_select %p148, %s147, 7
        %s150 = smul.addr %s149, 8
        %s151 = smul.addr %s150, 8
        %s152 = scalar_lea.vmem %s2, %s151
        %s153 = smul.u32 4, %s14
        %p154 = scmp.lt.s32.totalorder %s153, 7
        %s155 = scalar_select %p154, %s153, 7
        %s156 = smul.addr %s155, 2
        %s157 = smul.addr %s156, 8
        %s158 = scalar_lea.vmem %s0, %s157
        %s159 = smul.u32 4, %s14
        %s160 = smul.u32 4, %s14
        %p161 = scmp.lt.s32.totalorder %s160, 7
        %s162 = scalar_select %p161, %s160, 7
        %s163 = smul.addr %s162, 8
        %s164 = smul.addr %s163, 8
        %s165 = scalar_lea.vmem %s2, %s164
        %s166 = smul.u32 4, %s14
        %v167 = vld [vmem:[%s158] sm:$0xff]
        %v168 = vld [vmem:[%s158 + $0x8] sm:$0xff]
        %v169 = vld [vmem:[%s158 + $0x10] sm:$0xff]
        %v170 = vld [vmem:[%s158 + $0x18] sm:$0xff]
        %v171 = vld [vmem:[%s158 + $0x20] sm:$0xff]
        %v172 = vld [vmem:[%s158 + $0x28] sm:$0xff]
        %v173 = vld [vmem:[%s158 + $0x30] sm:$0xff]
        %v174 = vld [vmem:[%s158 + $0x38] sm:$0xff]
        %v175 = vld [vmem:[#allocation2] sm:$0xff]
        %v176 = vld [vmem:[#allocation2 + $0x8] sm:$0xff]
        %v177 = vld [vmem:[#allocation2 + $0x10] sm:$0xff]
        %v178 = vld [vmem:[#allocation2 + $0x18] sm:$0xff]
        %v179 = vld [vmem:[#allocation2 + $0x20] sm:$0xff]
        %v180 = vld [vmem:[#allocation2 + $0x28] sm:$0xff]
        %v181 = vld [vmem:[#allocation2 + $0x30] sm:$0xff]
        %v182 = vld [vmem:[#allocation2 + $0x38] sm:$0xff]
        %v183 = vld [vmem:[#allocation2 + $0x40] sm:$0xff]
        %v184 = vld [vmem:[#allocation2 + $0x48] sm:$0xff]
        %v185 = vld [vmem:[#allocation2 + $0x50] sm:$0xff]
        %v186 = vld [vmem:[#allocation2 + $0x58] sm:$0xff]
        %v187 = vld [vmem:[#allocation2 + $0x60] sm:$0xff]
        %v188 = vld [vmem:[#allocation2 + $0x68] sm:$0xff]
        %v189 = vld [vmem:[#allocation2 + $0x70] sm:$0xff]
        %v190 = vld [vmem:[#allocation2 + $0x78] sm:$0xff]
        %v191 = vld [vmem:[#allocation2 + $0x80] sm:$0xff]
        %v192 = vld [vmem:[#allocation2 + $0x88] sm:$0xff]
        %v193 = vld [vmem:[#allocation2 + $0x90] sm:$0xff]
        %v194 = vld [vmem:[#allocation2 + $0x98] sm:$0xff]
        %v195 = vld [vmem:[#allocation2 + $0xa0] sm:$0xff]
        %v196 = vld [vmem:[#allocation2 + $0xa8] sm:$0xff]
        %v197 = vld [vmem:[#allocation2 + $0xb0] sm:$0xff]
        %v198 = vld [vmem:[#allocation2 + $0xb8] sm:$0xff]
        %v199 = vld [vmem:[#allocation2 + $0xc0] sm:$0xff]
        %v200 = vld [vmem:[#allocation2 + $0xc8] sm:$0xff]
        %v201 = vld [vmem:[#allocation2 + $0xd0] sm:$0xff]
        %v202 = vld [vmem:[#allocation2 + $0xd8] sm:$0xff]
        %v203 = vld [vmem:[#allocation2 + $0xe0] sm:$0xff]
        %v204 = vld [vmem:[#allocation2 + $0xe8] sm:$0xff]
        %v205 = vld [vmem:[#allocation2 + $0xf0] sm:$0xff]
        %v206 = vld [vmem:[#allocation2 + $0xf8] sm:$0xff]
        %v207 = vld [vmem:[#allocation2 + $0x100] sm:$0xff]
        %v208 = vld [vmem:[#allocation2 + $0x108] sm:$0xff]
        %v209 = vld [vmem:[#allocation2 + $0x110] sm:$0xff]
        %v210 = vld [vmem:[#allocation2 + $0x118] sm:$0xff]
        %v211 = vld [vmem:[#allocation2 + $0x120] sm:$0xff]
        %v212 = vld [vmem:[#allocation2 + $0x128] sm:$0xff]
        %v213 = vld [vmem:[#allocation2 + $0x130] sm:$0xff]
        %v214 = vld [vmem:[#allocation2 + $0x138] sm:$0xff]
        %v215 = vld [vmem:[#allocation2 + $0x140] sm:$0xff]
        %v216 = vld [vmem:[#allocation2 + $0x148] sm:$0xff]
        %v217 = vld [vmem:[#allocation2 + $0x150] sm:$0xff]
        %v218 = vld [vmem:[#allocation2 + $0x158] sm:$0xff]
        %v219 = vld [vmem:[#allocation2 + $0x160] sm:$0xff]
        %v220 = vld [vmem:[#allocation2 + $0x168] sm:$0xff]
        %v221 = vld [vmem:[#allocation2 + $0x170] sm:$0xff]
        %v222 = vld [vmem:[#allocation2 + $0x178] sm:$0xff]
        %v223 = vld [vmem:[#allocation2 + $0x180] sm:$0xff]
        %v224 = vld [vmem:[#allocation2 + $0x188] sm:$0xff]
        %v225 = vld [vmem:[#allocation2 + $0x190] sm:$0xff]
        %v226 = vld [vmem:[#allocation2 + $0x198] sm:$0xff]
        %v227 = vld [vmem:[#allocation2 + $0x1a0] sm:$0xff]
        %v228 = vld [vmem:[#allocation2 + $0x1a8] sm:$0xff]
        %v229 = vld [vmem:[#allocation2 + $0x1b0] sm:$0xff]
        %v230 = vld [vmem:[#allocation2 + $0x1b8] sm:$0xff]
        %v231 = vld [vmem:[#allocation2 + $0x1c0] sm:$0xff]
        %v232 = vld [vmem:[#allocation2 + $0x1c8] sm:$0xff]
        %v233 = vld [vmem:[#allocation2 + $0x1d0] sm:$0xff]
        %v234 = vld [vmem:[#allocation2 + $0x1d8] sm:$0xff]
        %v235 = vld [vmem:[#allocation2 + $0x1e0] sm:$0xff]
        %v236 = vld [vmem:[#allocation2 + $0x1e8] sm:$0xff]
        %v237 = vld [vmem:[#allocation2 + $0x1f0] sm:$0xff]
        %v238 = vld [vmem:[#allocation2 + $0x1f8] sm:$0xff]
        %v239 = vld [vmem:[#allocation2 + $0x200] sm:$0xff]
        %v240 = vld [vmem:[#allocation2 + $0x208] sm:$0xff]
        %v241 = vld [vmem:[#allocation2 + $0x210] sm:$0xff]
        %v242 = vld [vmem:[#allocation2 + $0x218] sm:$0xff]
        %v243 = vld [vmem:[#allocation2 + $0x220] sm:$0xff]
        %v244 = vld [vmem:[#allocation2 + $0x228] sm:$0xff]
        %v245 = vld [vmem:[#allocation2 + $0x230] sm:$0xff]
        %v246 = vld [vmem:[#allocation2 + $0x238] sm:$0xff]
        %v247 = vld [vmem:[#allocation2 + $0x240] sm:$0xff]
        %v248 = vld [vmem:[#allocation2 + $0x248] sm:$0xff]
        %v249 = vld [vmem:[#allocation2 + $0x250] sm:$0xff]
        %v250 = vld [vmem:[#allocation2 + $0x258] sm:$0xff]
        %v251 = vld [vmem:[#allocation2 + $0x260] sm:$0xff]
        %v252 = vld [vmem:[#allocation2 + $0x268] sm:$0xff]
        %v253 = vld [vmem:[#allocation2 + $0x270] sm:$0xff]
        %v254 = vld [vmem:[#allocation2 + $0x278] sm:$0xff]
        %v255 = vld [vmem:[#allocation2 + $0x280] sm:$0xff]
        %v256 = vld [vmem:[#allocation2 + $0x288] sm:$0xff]
        %v257 = vld [vmem:[#allocation2 + $0x290] sm:$0xff]
        %v258 = vld [vmem:[#allocation2 + $0x298] sm:$0xff]
        %v259 = vld [vmem:[#allocation2 + $0x2a0] sm:$0xff]
        %v260 = vld [vmem:[#allocation2 + $0x2a8] sm:$0xff]
        %v261 = vld [vmem:[#allocation2 + $0x2b0] sm:$0xff]
        %v262 = vld [vmem:[#allocation2 + $0x2b8] sm:$0xff]
        %v263 = vld [vmem:[#allocation2 + $0x2c0] sm:$0xff]
        %v264 = vld [vmem:[#allocation2 + $0x2c8] sm:$0xff]
        %v265 = vld [vmem:[#allocation2 + $0x2d0] sm:$0xff]
        %v266 = vld [vmem:[#allocation2 + $0x2d8] sm:$0xff]
        %v267 = vld [vmem:[#allocation2 + $0x2e0] sm:$0xff]
        %v268 = vld [vmem:[#allocation2 + $0x2e8] sm:$0xff]
        %v269 = vld [vmem:[#allocation2 + $0x2f0] sm:$0xff]
        %v270 = vld [vmem:[#allocation2 + $0x2f8] sm:$0xff]
        %v271 = vld [vmem:[#allocation2 + $0x300] sm:$0xff]
        %v272 = vld [vmem:[#allocation2 + $0x308] sm:$0xff]
        %v273 = vld [vmem:[#allocation2 + $0x310] sm:$0xff]
        %v274 = vld [vmem:[#allocation2 + $0x318] sm:$0xff]
        %v275 = vld [vmem:[#allocation2 + $0x320] sm:$0xff]
        %v276 = vld [vmem:[#allocation2 + $0x328] sm:$0xff]
        %v277 = vld [vmem:[#allocation2 + $0x330] sm:$0xff]
        %v278 = vld [vmem:[#allocation2 + $0x338] sm:$0xff]
        %v279 = vld [vmem:[#allocation2 + $0x340] sm:$0xff]
        %v280 = vld [vmem:[#allocation2 + $0x348] sm:$0xff]
        %v281 = vld [vmem:[#allocation2 + $0x350] sm:$0xff]
        %v282 = vld [vmem:[#allocation2 + $0x358] sm:$0xff]
        %v283 = vld [vmem:[#allocation2 + $0x360] sm:$0xff]
        %v284 = vld [vmem:[#allocation2 + $0x368] sm:$0xff]
        %v285 = vld [vmem:[#allocation2 + $0x370] sm:$0xff]
        %v286 = vld [vmem:[#allocation2 + $0x378] sm:$0xff]
        %v287 = vld [vmem:[#allocation2 + $0x380] sm:$0xff]
        %v288 = vld [vmem:[#allocation2 + $0x388] sm:$0xff]
        %v289 = vld [vmem:[#allocation2 + $0x390] sm:$0xff]
        %v290 = vld [vmem:[#allocation2 + $0x398] sm:$0xff]
        %v291 = vld [vmem:[#allocation2 + $0x3a0] sm:$0xff]
        %v292 = vld [vmem:[#allocation2 + $0x3a8] sm:$0xff]
        %v293 = vld [vmem:[#allocation2 + $0x3b0] sm:$0xff]
        %v294 = vld [vmem:[#allocation2 + $0x3b8] sm:$0xff]
        %v295 = vld [vmem:[#allocation2 + $0x3c0] sm:$0xff]
        %v296 = vld [vmem:[#allocation2 + $0x3c8] sm:$0xff]
        %v297 = vld [vmem:[#allocation2 + $0x3d0] sm:$0xff]
        %v298 = vld [vmem:[#allocation2 + $0x3d8] sm:$0xff]
        %v299 = vld [vmem:[#allocation2 + $0x3e0] sm:$0xff]
        %v300 = vld [vmem:[#allocation2 + $0x3e8] sm:$0xff]
        %v301 = vld [vmem:[#allocation2 + $0x3f0] sm:$0xff]
        %v302 = vld [vmem:[#allocation2 + $0x3f8] sm:$0xff]
        %v303 = vld [vmem:[#allocation2 + $0x400] sm:$0xff]
        %v304 = vld [vmem:[#allocation2 + $0x408] sm:$0xff]
        %v305 = vld [vmem:[#allocation2 + $0x410] sm:$0xff]
        %v306 = vld [vmem:[#allocation2 + $0x418] sm:$0xff]
        %v307 = vld [vmem:[#allocation2 + $0x420] sm:$0xff]
        %v308 = vld [vmem:[#allocation2 + $0x428] sm:$0xff]
        %v309 = vld [vmem:[#allocation2 + $0x430] sm:$0xff]
        %v310 = vld [vmem:[#allocation2 + $0x438] sm:$0xff]
        %v311 = vld [vmem:[#allocation2 + $0x440] sm:$0xff]
        %v312 = vld [vmem:[#allocation2 + $0x448] sm:$0xff]
        %v313 = vld [vmem:[#allocation2 + $0x450] sm:$0xff]
        %v314 = vld [vmem:[#allocation2 + $0x458] sm:$0xff]
        %v315 = vld [vmem:[#allocation2 + $0x460] sm:$0xff]
        %v316 = vld [vmem:[#allocation2 + $0x468] sm:$0xff]
        %v317 = vld [vmem:[#allocation2 + $0x470] sm:$0xff]
        %v318 = vld [vmem:[#allocation2 + $0x478] sm:$0xff]
        %v319 = vld [vmem:[#allocation2 + $0x480] sm:$0xff]
        %v320 = vld [vmem:[#allocation2 + $0x488] sm:$0xff]
        %v321 = vld [vmem:[#allocation2 + $0x490] sm:$0xff]
        %v322 = vld [vmem:[#allocation2 + $0x498] sm:$0xff]
        %v323 = vld [vmem:[#allocation2 + $0x4a0] sm:$0xff]
        %v324 = vld [vmem:[#allocation2 + $0x4a8] sm:$0xff]
        %v325 = vld [vmem:[#allocation2 + $0x4b0] sm:$0xff]
        %v326 = vld [vmem:[#allocation2 + $0x4b8] sm:$0xff]
        %v327 = vld [vmem:[#allocation2 + $0x4c0] sm:$0xff]
        %v328 = vld [vmem:[#allocation2 + $0x4c8] sm:$0xff]
        %v329 = vld [vmem:[#allocation2 + $0x4d0] sm:$0xff]
        %v330 = vld [vmem:[#allocation2 + $0x4d8] sm:$0xff]
        %v331 = vld [vmem:[#allocation2 + $0x4e0] sm:$0xff]
        %v332 = vld [vmem:[#allocation2 + $0x4e8] sm:$0xff]
        %v333 = vld [vmem:[#allocation2 + $0x4f0] sm:$0xff]
        %v334 = vld [vmem:[#allocation2 + $0x4f8] sm:$0xff]
        %v335 = vld [vmem:[#allocation2 + $0x500] sm:$0xff]
        %v336 = vld [vmem:[#allocation2 + $0x508] sm:$0xff]
        %v337 = vld [vmem:[#allocation2 + $0x510] sm:$0xff]
        %v338 = vld [vmem:[#allocation2 + $0x518] sm:$0xff]
        %v339 = vld [vmem:[#allocation2 + $0x520] sm:$0xff]
        %v340 = vld [vmem:[#allocation2 + $0x528] sm:$0xff]
        %v341 = vld [vmem:[#allocation2 + $0x530] sm:$0xff]
        %v342 = vld [vmem:[#allocation2 + $0x538] sm:$0xff]
        %v343 = vld [vmem:[#allocation2 + $0x540] sm:$0xff]
        %v344 = vld [vmem:[#allocation2 + $0x548] sm:$0xff]
        %v345 = vld [vmem:[#allocation2 + $0x550] sm:$0xff]
        %v346 = vld [vmem:[#allocation2 + $0x558] sm:$0xff]
        %v347 = vld [vmem:[#allocation2 + $0x560] sm:$0xff]
        %v348 = vld [vmem:[#allocation2 + $0x568] sm:$0xff]
        %v349 = vld [vmem:[#allocation2 + $0x570] sm:$0xff]
        %v350 = vld [vmem:[#allocation2 + $0x578] sm:$0xff]
        %v351 = vld [vmem:[#allocation2 + $0x580] sm:$0xff]
        %v352 = vld [vmem:[#allocation2 + $0x588] sm:$0xff]
        %v353 = vld [vmem:[#allocation2 + $0x590] sm:$0xff]
        %v354 = vld [vmem:[#allocation2 + $0x598] sm:$0xff]
        %v355 = vld [vmem:[#allocation2 + $0x5a0] sm:$0xff]
        %v356 = vld [vmem:[#allocation2 + $0x5a8] sm:$0xff]
        %v357 = vld [vmem:[#allocation2 + $0x5b0] sm:$0xff]
        %v358 = vld [vmem:[#allocation2 + $0x5b8] sm:$0xff]
        %v359 = vld [vmem:[#allocation2 + $0x5c0] sm:$0xff]
        %v360 = vld [vmem:[#allocation2 + $0x5c8] sm:$0xff]
        %v361 = vld [vmem:[#allocation2 + $0x5d0] sm:$0xff]
        %v362 = vld [vmem:[#allocation2 + $0x5d8] sm:$0xff]
        %v363 = vld [vmem:[#allocation2 + $0x5e0] sm:$0xff]
        %v364 = vld [vmem:[#allocation2 + $0x5e8] sm:$0xff]
        %v365 = vld [vmem:[#allocation2 + $0x5f0] sm:$0xff]
        %v366 = vld [vmem:[#allocation2 + $0x5f8] sm:$0xff]
        %v367 = vld [vmem:[#allocation2 + $0x600] sm:$0xff]
        %v368 = vld [vmem:[#allocation2 + $0x608] sm:$0xff]
        %v369 = vld [vmem:[#allocation2 + $0x610] sm:$0xff]
        %v370 = vld [vmem:[#allocation2 + $0x618] sm:$0xff]
        %v371 = vld [vmem:[#allocation2 + $0x620] sm:$0xff]
        %v372 = vld [vmem:[#allocation2 + $0x628] sm:$0xff]
        %v373 = vld [vmem:[#allocation2 + $0x630] sm:$0xff]
        %v374 = vld [vmem:[#allocation2 + $0x638] sm:$0xff]
        %v375 = vld [vmem:[#allocation2 + $0x640] sm:$0xff]
        %v376 = vld [vmem:[#allocation2 + $0x648] sm:$0xff]
        %v377 = vld [vmem:[#allocation2 + $0x650] sm:$0xff]
        %v378 = vld [vmem:[#allocation2 + $0x658] sm:$0xff]
        %v379 = vld [vmem:[#allocation2 + $0x660] sm:$0xff]
        %v380 = vld [vmem:[#allocation2 + $0x668] sm:$0xff]
        %v381 = vld [vmem:[#allocation2 + $0x670] sm:$0xff]
        %v382 = vld [vmem:[#allocation2 + $0x678] sm:$0xff]
        %v383 = vld [vmem:[#allocation2 + $0x680] sm:$0xff]
        %v384 = vld [vmem:[#allocation2 + $0x688] sm:$0xff]
        %v385 = vld [vmem:[#allocation2 + $0x690] sm:$0xff]
        %v386 = vld [vmem:[#allocation2 + $0x698] sm:$0xff]
        %v387 = vld [vmem:[#allocation2 + $0x6a0] sm:$0xff]
        %v388 = vld [vmem:[#allocation2 + $0x6a8] sm:$0xff]
        %v389 = vld [vmem:[#allocation2 + $0x6b0] sm:$0xff]
        %v390 = vld [vmem:[#allocation2 + $0x6b8] sm:$0xff]
        %v391 = vld [vmem:[#allocation2 + $0x6c0] sm:$0xff]
        %v392 = vld [vmem:[#allocation2 + $0x6c8] sm:$0xff]
        %v393 = vld [vmem:[#allocation2 + $0x6d0] sm:$0xff]
        %v394 = vld [vmem:[#allocation2 + $0x6d8] sm:$0xff]
        %v395 = vld [vmem:[#allocation2 + $0x6e0] sm:$0xff]
        %v396 = vld [vmem:[#allocation2 + $0x6e8] sm:$0xff]
        %v397 = vld [vmem:[#allocation2 + $0x6f0] sm:$0xff]
        %v398 = vld [vmem:[#allocation2 + $0x6f8] sm:$0xff]
        %v399 = vld [vmem:[#allocation2 + $0x700] sm:$0xff]
        %v400 = vld [vmem:[#allocation2 + $0x708] sm:$0xff]
        %v401 = vld [vmem:[#allocation2 + $0x710] sm:$0xff]
        %v402 = vld [vmem:[#allocation2 + $0x718] sm:$0xff]
        %v403 = vld [vmem:[#allocation2 + $0x720] sm:$0xff]
        %v404 = vld [vmem:[#allocation2 + $0x728] sm:$0xff]
        %v405 = vld [vmem:[#allocation2 + $0x730] sm:$0xff]
        %v406 = vld [vmem:[#allocation2 + $0x738] sm:$0xff]
        %v407 = vld [vmem:[#allocation2 + $0x740] sm:$0xff]
        %v408 = vld [vmem:[#allocation2 + $0x748] sm:$0xff]
        %v409 = vld [vmem:[#allocation2 + $0x750] sm:$0xff]
        %v410 = vld [vmem:[#allocation2 + $0x758] sm:$0xff]
        %v411 = vld [vmem:[#allocation2 + $0x760] sm:$0xff]
        %v412 = vld [vmem:[#allocation2 + $0x768] sm:$0xff]
        %v413 = vld [vmem:[#allocation2 + $0x770] sm:$0xff]
        %v414 = vld [vmem:[#allocation2 + $0x778] sm:$0xff]
        %v415 = vld [vmem:[#allocation2 + $0x780] sm:$0xff]
        %v416 = vld [vmem:[#allocation2 + $0x788] sm:$0xff]
        %v417 = vld [vmem:[#allocation2 + $0x790] sm:$0xff]
        %v418 = vld [vmem:[#allocation2 + $0x798] sm:$0xff]
        %v419 = vld [vmem:[#allocation2 + $0x7a0] sm:$0xff]
        %v420 = vld [vmem:[#allocation2 + $0x7a8] sm:$0xff]
        %v421 = vld [vmem:[#allocation2 + $0x7b0] sm:$0xff]
        %v422 = vld [vmem:[#allocation2 + $0x7b8] sm:$0xff]
        %v423 = vld [vmem:[#allocation2 + $0x7c0] sm:$0xff]
        %v424 = vld [vmem:[#allocation2 + $0x7c8] sm:$0xff]
        %v425 = vld [vmem:[#allocation2 + $0x7d0] sm:$0xff]
        %v426 = vld [vmem:[#allocation2 + $0x7d8] sm:$0xff]
        %v427 = vld [vmem:[#allocation2 + $0x7e0] sm:$0xff]
        %v428 = vld [vmem:[#allocation2 + $0x7e8] sm:$0xff]
        %v429 = vld [vmem:[#allocation2 + $0x7f0] sm:$0xff]
        %v430 = vld [vmem:[#allocation2 + $0x7f8] sm:$0xff]
        %431 = vmatprep.subr.mxu0 %v176
        %432 = vmatpush1.msra.mxu0 %v175
        %433 = vmatprep.subr.mxu0 %v184
        %434 = vmatpush1.msra.mxu0 %v183
        %435 = vmatprep.subr.mxu0 %v192
        %436 = vmatpush1.msra.mxu0 %v191
        %437 = vmatprep.subr.mxu0 %v200
        %438 = vmatpush1.msra.mxu0 %v199
        %439 = vmatprep.subr.mxu0 %v208
        %440 = vmatpush1.msra.mxu0 %v207
        %441 = vmatprep.subr.mxu0 %v216
        %442 = vmatpush1.msra.mxu0 %v215
        %443 = vmatprep.subr.mxu0 %v224
        %444 = vmatpush1.msra.mxu0 %v223
        %445 = vmatprep.subr.mxu0 %v232
        %446 = vmatpush1.msra.mxu0 %v231
        %447 = vmatprep.subr.mxu0 %v240
        %448 = vmatpush1.msra.mxu0 %v239
        %449 = vmatprep.subr.mxu0 %v248
        %450 = vmatpush1.msra.mxu0 %v247
        %451 = vmatprep.subr.mxu0 %v256
        %452 = vmatpush1.msra.mxu0 %v255
        %453 = vmatprep.subr.mxu0 %v264
        %454 = vmatpush1.msra.mxu0 %v263
        %455 = vmatprep.subr.mxu0 %v272
        %456 = vmatpush1.msra.mxu0 %v271
        %457 = vmatprep.subr.mxu0 %v280
        %458 = vmatpush1.msra.mxu0 %v279
        %459 = vmatprep.subr.mxu0 %v288
        %460 = vmatpush1.msra.mxu0 %v287
        %461 = vmatprep.subr.mxu0 %v296
        %462 = vmatpush1.msra.mxu0 %v295
        %463 = vmatprep.subr.mxu0 %v304
        %464 = vmatpush1.msra.mxu0 %v303
        %465 = vmatprep.subr.mxu0 %v312
        %466 = vmatpush1.msra.mxu0 %v311
        %467 = vmatprep.subr.mxu0 %v320
        %468 = vmatpush1.msra.mxu0 %v319
        %469 = vmatprep.subr.mxu0 %v328
        %470 = vmatpush1.msra.mxu0 %v327
        %471 = vmatprep.subr.mxu0 %v336
        %472 = vmatpush1.msra.mxu0 %v335
        %473 = vmatprep.subr.mxu0 %v344
        %474 = vmatpush1.msra.mxu0 %v343
        %475 = vmatprep.subr.mxu0 %v352
        %476 = vmatpush1.msra.mxu0 %v351
        %477 = vmatprep.subr.mxu0 %v360
        %478 = vmatpush1.msra.mxu0 %v359
        %479 = vmatprep.subr.mxu0 %v368
        %480 = vmatpush1.msra.mxu0 %v367
        %481 = vmatprep.subr.mxu0 %v376
        %482 = vmatpush1.msra.mxu0 %v375
        %483 = vmatprep.subr.mxu0 %v384
        %484 = vmatpush1.msra.mxu0 %v383
        %485 = vmatprep.subr.mxu0 %v392
        %486 = vmatpush1.msra.mxu0 %v391
        %487 = vmatprep.subr.mxu0 %v400
        %488 = vmatpush1.msra.mxu0 %v399
        %489 = vmatprep.subr.mxu0 %v408
        %490 = vmatpush1.msra.mxu0 %v407
        %491 = vmatprep.subr.mxu0 %v416
        %492 = vmatpush1.msra.mxu0 %v415
        %493 = vmatprep.subr.mxu0 %v424
        %494 = vmatpush1.msra.mxu0 %v423
        %495 = vmatprep.mubr.f32.mxu0 %v168
        %496 = vmatmul.mubr.f32.gmra.mrb[0].mxu0 %v167
        %v497 = vpop.f32.mrb[0].mxu0
        %v498 = vadd.f32 0.0, %v497
        %v499 = vpop.f32.mrb[0].mxu0
        %v500 = vadd.f32 0.0, %v499
        %501 = vmatprep.mubr.f32.mxu0 %v170
        %502 = vmatmul.mubr.f32.gmra.mrb[0].mxu0 %v169
        %v503 = vpop.f32.mrb[0].mxu0
        %v504 = vadd.f32 0.0, %v503
        %v505 = vpop.f32.mrb[0].mxu0
        %v506 = vadd.f32 0.0, %v505
        %507 = vmatprep.mubr.f32.mxu0 %v172
        %508 = vmatmul.mubr.f32.gmra.mrb[0].mxu0 %v171
        %v509 = vpop.f32.mrb[0].mxu0
        %v510 = vadd.f32 0.0, %v509
        %v511 = vpop.f32.mrb[0].mxu0
        %v512 = vadd.f32 0.0, %v511
        %513 = vmatprep.mubr.f32.mxu0 %v174
        %514 = vmatmul.mubr.f32.gmra.mrb[0].mxu0 %v173
        %v515 = vpop.f32.mrb[0].mxu0
        %v516 = vadd.f32 0.0, %v515
        %v517 = vpop.f32.mrb[0].mxu0
        %v518 = vadd.f32 0.0, %v517
        %519 = vdwg.mxu0
        %520 = vmatprep.subr.mxu0 %v178
        %521 = vmatpush1.msra.mxu0 %v177
        %522 = vmatprep.subr.mxu0 %v186
        %523 = vmatpush1.msra.mxu0 %v185
        %524 = vmatprep.subr.mxu0 %v194
        %525 = vmatpush1.msra.mxu0 %v193
        %526 = vmatprep.subr.mxu0 %v202
        %527 = vmatpush1.msra.mxu0 %v201
        %528 = vmatprep.subr.mxu0 %v210
        %529 = vmatpush1.msra.mxu0 %v209
        %530 = vmatprep.subr.mxu0 %v218
        %531 = vmatpush1.msra.mxu0 %v217
        %532 = vmatprep.subr.mxu0 %v226
        %533 = vmatpush1.msra.mxu0 %v225
        %534 = vmatprep.subr.mxu0 %v234
        %535 = vmatpush1.msra.mxu0 %v233
        %536 = vmatprep.subr.mxu0 %v242
        %537 = vmatpush1.msra.mxu0 %v241
        %538 = vmatprep.subr.mxu0 %v250
        %539 = vmatpush1.msra.mxu0 %v249
        %540 = vmatprep.subr.mxu0 %v258
        %541 = vmatpush1.msra.mxu0 %v257
        %542 = vmatprep.subr.mxu0 %v266
        %543 = vmatpush1.msra.mxu0 %v265
        %544 = vmatprep.subr.mxu0 %v274
        %545 = vmatpush1.msra.mxu0 %v273
        %546 = vmatprep.subr.mxu0 %v282
        %547 = vmatpush1.msra.mxu0 %v281
        %548 = vmatprep.subr.mxu0 %v290
        %549 = vmatpush1.msra.mxu0 %v289
        %550 = vmatprep.subr.mxu0 %v298
        %551 = vmatpush1.msra.mxu0 %v297
        %552 = vmatprep.subr.mxu0 %v306
        %553 = vmatpush1.msra.mxu0 %v305
        %554 = vmatprep.subr.mxu0 %v314
        %555 = vmatpush1.msra.mxu0 %v313
        %556 = vmatprep.subr.mxu0 %v322
        %557 = vmatpush1.msra.mxu0 %v321
        %558 = vmatprep.subr.mxu0 %v330
        %559 = vmatpush1.msra.mxu0 %v329
        %560 = vmatprep.subr.mxu0 %v338
        %561 = vmatpush1.msra.mxu0 %v337
        %562 = vmatprep.subr.mxu0 %v346
        %563 = vmatpush1.msra.mxu0 %v345
        %564 = vmatprep.subr.mxu0 %v354
        %565 = vmatpush1.msra.mxu0 %v353
        %566 = vmatprep.subr.mxu0 %v362
        %567 = vmatpush1.msra.mxu0 %v361
        %568 = vmatprep.subr.mxu0 %v370
        %569 = vmatpush1.msra.mxu0 %v369
        %570 = vmatprep.subr.mxu0 %v378
        %571 = vmatpush1.msra.mxu0 %v377
        %572 = vmatprep.subr.mxu0 %v386
        %573 = vmatpush1.msra.mxu0 %v385
        %574 = vmatprep.subr.mxu0 %v394
        %575 = vmatpush1.msra.mxu0 %v393
        %576 = vmatprep.subr.mxu0 %v402
        %577 = vmatpush1.msra.mxu0 %v401
        %578 = vmatprep.subr.mxu0 %v410
        %579 = vmatpush1.msra.mxu0 %v409
        %580 = vmatprep.subr.mxu0 %v418
        %581 = vmatpush1.msra.mxu0 %v417
        %582 = vmatprep.subr.mxu0 %v426
        %583 = vmatpush1.msra.mxu0 %v425
        %584 = vmatprep.mubr.f32.mxu0 %v168
        %585 = vmatmul.mubr.f32.gmra.mrb[0].mxu0 %v167
        %v586 = vpop.f32.mrb[0].mxu0
        %v587 = vadd.f32 0.0, %v586
        %v588 = vpop.f32.mrb[0].mxu0
        %v589 = vadd.f32 0.0, %v588
        %590 = vmatprep.mubr.f32.mxu0 %v170
        %591 = vmatmul.mubr.f32.gmra.mrb[0].mxu0 %v169
        %v592 = vpop.f32.mrb[0].mxu0
        %v593 = vadd.f32 0.0, %v592
        %v594 = vpop.f32.mrb[0].mxu0
        %v595 = vadd.f32 0.0, %v594
        %596 = vmatprep.mubr.f32.mxu0 %v172
        %597 = vmatmul.mubr.f32.gmra.mrb[0].mxu0 %v171
        %v598 = vpop.f32.mrb[0].mxu0
        %v599 = vadd.f32 0.0, %v598
        %v600 = vpop.f32.mrb[0].mxu0
        %v601 = vadd.f32 0.0, %v600
        %602 = vmatprep.mubr.f32.mxu0 %v174
        %603 = vmatmul.mubr.f32.gmra.mrb[0].mxu0 %v173
        %v604 = vpop.f32.mrb[0].mxu0
        %v605 = vadd.f32 0.0, %v604
        %v606 = vpop.f32.mrb[0].mxu0
        %v607 = vadd.f32 0.0, %v606
        %608 = vdwg.mxu0
        %609 = vmatprep.subr.mxu0 %v180
        %610 = vmatpush1.msra.mxu0 %v179
        %611 = vmatprep.subr.mxu0 %v188
        %612 = vmatpush1.msra.mxu0 %v187
        %613 = vmatprep.subr.mxu0 %v196
        %614 = vmatpush1.msra.mxu0 %v195
        %615 = vmatprep.subr.mxu0 %v204
        %616 = vmatpush1.msra.mxu0 %v203
        %617 = vmatprep.subr.mxu0 %v212
        %618 = vmatpush1.msra.mxu0 %v211
        %619 = vmatprep.subr.mxu0 %v220
        %620 = vmatpush1.msra.mxu0 %v219
        %621 = vmatprep.subr.mxu0 %v228
        %622 = vmatpush1.msra.mxu0 %v227
        %623 = vmatprep.subr.mxu0 %v236
        %624 = vmatpush1.msra.mxu0 %v235
        %625 = vmatprep.subr.mxu0 %v244
        %626 = vmatpush1.msra.mxu0 %v243
        %627 = vmatprep.subr.mxu0 %v252
        %628 = vmatpush1.msra.mxu0 %v251
        %629 = vmatprep.subr.mxu0 %v260
        %630 = vmatpush1.msra.mxu0 %v259
        %631 = vmatprep.subr.mxu0 %v268
        %632 = vmatpush1.msra.mxu0 %v267
        %633 = vmatprep.subr.mxu0 %v276
        %634 = vmatpush1.msra.mxu0 %v275
        %635 = vmatprep.subr.mxu0 %v284
        %636 = vmatpush1.msra.mxu0 %v283
        %637 = vmatprep.subr.mxu0 %v292
        %638 = vmatpush1.msra.mxu0 %v291
        %639 = vmatprep.subr.mxu0 %v300
        %640 = vmatpush1.msra.mxu0 %v299
        %641 = vmatprep.subr.mxu0 %v308
        %642 = vmatpush1.msra.mxu0 %v307
        %643 = vmatprep.subr.mxu0 %v316
        %644 = vmatpush1.msra.mxu0 %v315
        %645 = vmatprep.subr.mxu0 %v324
        %646 = vmatpush1.msra.mxu0 %v323
        %647 = vmatprep.subr.mxu0 %v332
        %648 = vmatpush1.msra.mxu0 %v331
        %649 = vmatprep.subr.mxu0 %v340
        %650 = vmatpush1.msra.mxu0 %v339
        %651 = vmatprep.subr.mxu0 %v348
        %652 = vmatpush1.msra.mxu0 %v347
        %653 = vmatprep.subr.mxu0 %v356
        %654 = vmatpush1.msra.mxu0 %v355
        %655 = vmatprep.subr.mxu0 %v364
        %656 = vmatpush1.msra.mxu0 %v363
        %657 = vmatprep.subr.mxu0 %v372
        %658 = vmatpush1.msra.mxu0 %v371
        %659 = vmatprep.subr.mxu0 %v380
        %660 = vmatpush1.msra.mxu0 %v379
        %661 = vmatprep.subr.mxu0 %v388
        %662 = vmatpush1.msra.mxu0 %v387
        %663 = vmatprep.subr.mxu0 %v396
        %664 = vmatpush1.msra.mxu0 %v395
        %665 = vmatprep.subr.mxu0 %v404
        %666 = vmatpush1.msra.mxu0 %v403
        %667 = vmatprep.subr.mxu0 %v412
        %668 = vmatpush1.msra.mxu0 %v411
        %669 = vmatprep.subr.mxu0 %v420
        %670 = vmatpush1.msra.mxu0 %v419
        %671 = vmatprep.subr.mxu0 %v428
        %672 = vmatpush1.msra.mxu0 %v427
        %673 = vmatprep.mubr.f32.mxu0 %v168
        %674 = vmatmul.mubr.f32.gmra.mrb[0].mxu0 %v167
        %v675 = vpop.f32.mrb[0].mxu0
        %v676 = vadd.f32 0.0, %v675
        %v677 = vpop.f32.mrb[0].mxu0
        %v678 = vadd.f32 0.0, %v677
        %679 = vmatprep.mubr.f32.mxu0 %v170
        %680 = vmatmul.mubr.f32.gmra.mrb[0].mxu0 %v169
        %v681 = vpop.f32.mrb[0].mxu0
        %v682 = vadd.f32 0.0, %v681
        %v683 = vpop.f32.mrb[0].mxu0
        %v684 = vadd.f32 0.0, %v683
        %685 = vmatprep.mubr.f32.mxu0 %v172
        %686 = vmatmul.mubr.f32.gmra.mrb[0].mxu0 %v171
        %v687 = vpop.f32.mrb[0].mxu0
        %v688 = vadd.f32 0.0, %v687
        %v689 = vpop.f32.mrb[0].mxu0
        %v690 = vadd.f32 0.0, %v689
        %691 = vmatprep.mubr.f32.mxu0 %v174
        %692 = vmatmul.mubr.f32.gmra.mrb[0].mxu0 %v173
        %v693 = vpop.f32.mrb[0].mxu0
        %v694 = vadd.f32 0.0, %v693
        %v695 = vpop.f32.mrb[0].mxu0
        %v696 = vadd.f32 0.0, %v695
        %697 = vdwg.mxu0
        %698 = vmatprep.subr.mxu0 %v182
        %699 = vmatpush1.msra.mxu0 %v181
        %700 = vmatprep.subr.mxu0 %v190
        %701 = vmatpush1.msra.mxu0 %v189
        %702 = vmatprep.subr.mxu0 %v198
        %703 = vmatpush1.msra.mxu0 %v197
        %704 = vmatprep.subr.mxu0 %v206
        %705 = vmatpush1.msra.mxu0 %v205
        %706 = vmatprep.subr.mxu0 %v214
        %707 = vmatpush1.msra.mxu0 %v213
        %708 = vmatprep.subr.mxu0 %v222
        %709 = vmatpush1.msra.mxu0 %v221
        %710 = vmatprep.subr.mxu0 %v230
        %711 = vmatpush1.msra.mxu0 %v229
        %712 = vmatprep.subr.mxu0 %v238
        %713 = vmatpush1.msra.mxu0 %v237
        %714 = vmatprep.subr.mxu0 %v246
        %715 = vmatpush1.msra.mxu0 %v245
        %716 = vmatprep.subr.mxu0 %v254
        %717 = vmatpush1.msra.mxu0 %v253
        %718 = vmatprep.subr.mxu0 %v262
        %719 = vmatpush1.msra.mxu0 %v261
        %720 = vmatprep.subr.mxu0 %v270
        %721 = vmatpush1.msra.mxu0 %v269
        %722 = vmatprep.subr.mxu0 %v278
        %723 = vmatpush1.msra.mxu0 %v277
        %724 = vmatprep.subr.mxu0 %v286
        %725 = vmatpush1.msra.mxu0 %v285
        %726 = vmatprep.subr.mxu0 %v294
        %727 = vmatpush1.msra.mxu0 %v293
        %728 = vmatprep.subr.mxu0 %v302
        %729 = vmatpush1.msra.mxu0 %v301
        %730 = vmatprep.subr.mxu0 %v310
        %731 = vmatpush1.msra.mxu0 %v309
        %732 = vmatprep.subr.mxu0 %v318
        %733 = vmatpush1.msra.mxu0 %v317
        %734 = vmatprep.subr.mxu0 %v326
        %735 = vmatpush1.msra.mxu0 %v325
        %736 = vmatprep.subr.mxu0 %v334
        %737 = vmatpush1.msra.mxu0 %v333
        %738 = vmatprep.subr.mxu0 %v342
        %739 = vmatpush1.msra.mxu0 %v341
        %740 = vmatprep.subr.mxu0 %v350
        %741 = vmatpush1.msra.mxu0 %v349
        %742 = vmatprep.subr.mxu0 %v358
        %743 = vmatpush1.msra.mxu0 %v357
        %744 = vmatprep.subr.mxu0 %v366
        %745 = vmatpush1.msra.mxu0 %v365
        %746 = vmatprep.subr.mxu0 %v374
        %747 = vmatpush1.msra.mxu0 %v373
        %748 = vmatprep.subr.mxu0 %v382
        %749 = vmatpush1.msra.mxu0 %v381
        %750 = vmatprep.subr.mxu0 %v390
        %751 = vmatpush1.msra.mxu0 %v389
        %752 = vmatprep.subr.mxu0 %v398
        %753 = vmatpush1.msra.mxu0 %v397
        %754 = vmatprep.subr.mxu0 %v406
        %755 = vmatpush1.msra.mxu0 %v405
        %756 = vmatprep.subr.mxu0 %v414
        %757 = vmatpush1.msra.mxu0 %v413
        %758 = vmatprep.subr.mxu0 %v422
        %759 = vmatpush1.msra.mxu0 %v421
        %760 = vmatprep.subr.mxu0 %v430
        %761 = vmatpush1.msra.mxu0 %v429
        %762 = vmatprep.mubr.f32.mxu0 %v168
        %763 = vmatmul.mubr.f32.gmra.mrb[0].mxu0 %v167
        %v764 = vpop.f32.mrb[0].mxu0
        %v765 = vadd.f32 0.0, %v764
        %v766 = vpop.f32.mrb[0].mxu0
        %v767 = vadd.f32 0.0, %v766
        %768 = vmatprep.mubr.f32.mxu0 %v170
        %769 = vmatmul.mubr.f32.gmra.mrb[0].mxu0 %v169
        %v770 = vpop.f32.mrb[0].mxu0
        %v771 = vadd.f32 0.0, %v770
        %v772 = vpop.f32.mrb[0].mxu0
        %v773 = vadd.f32 0.0, %v772
        %774 = vmatprep.mubr.f32.mxu0 %v172
        %775 = vmatmul.mubr.f32.gmra.mrb[0].mxu0 %v171
        %v776 = vpop.f32.mrb[0].mxu0
        %v777 = vadd.f32 0.0, %v776
        %v778 = vpop.f32.mrb[0].mxu0
        %v779 = vadd.f32 0.0, %v778
        %780 = vmatprep.mubr.f32.mxu0 %v174
        %781 = vmatmul.mubr.f32.gmra.mrb[0].mxu0 %v173
        %v782 = vpop.f32.mrb[0].mxu0
        %v783 = vadd.f32 0.0, %v782
        %v784 = vpop.f32.mrb[0].mxu0
        %v785 = vadd.f32 0.0, %v784
        %786 = vdwg.mxu0
        %787 = vst [vmem:[%s165] sm:$0xff] %v498
        %788 = vst [vmem:[%s165 + $0x8] sm:$0xff] %v500
        %789 = vst [vmem:[%s165 + $0x10] sm:$0xff] %v587
        %790 = vst [vmem:[%s165 + $0x18] sm:$0xff] %v589
        %791 = vst [vmem:[%s165 + $0x20] sm:$0xff] %v676
        %792 = vst [vmem:[%s165 + $0x28] sm:$0xff] %v678
        %793 = vst [vmem:[%s165 + $0x30] sm:$0xff] %v765
        %794 = vst [vmem:[%s165 + $0x38] sm:$0xff] %v767
        %795 = vst [vmem:[%s165 + $0x40] sm:$0xff] %v504
        %796 = vst [vmem:[%s165 + $0x48] sm:$0xff] %v506
        %797 = vst [vmem:[%s165 + $0x50] sm:$0xff] %v593
        %798 = vst [vmem:[%s165 + $0x58] sm:$0xff] %v595
        %799 = vst [vmem:[%s165 + $0x60] sm:$0xff] %v682
        %800 = vst [vmem:[%s165 + $0x68] sm:$0xff] %v684
        %801 = vst [vmem:[%s165 + $0x70] sm:$0xff] %v771
        %802 = vst [vmem:[%s165 + $0x78] sm:$0xff] %v773
        %803 = vst [vmem:[%s165 + $0x80] sm:$0xff] %v510
        %804 = vst [vmem:[%s165 + $0x88] sm:$0xff] %v512
        %805 = vst [vmem:[%s165 + $0x90] sm:$0xff] %v599
        %806 = vst [vmem:[%s165 + $0x98] sm:$0xff] %v601
        %807 = vst [vmem:[%s165 + $0xa0] sm:$0xff] %v688
        %808 = vst [vmem:[%s165 + $0xa8] sm:$0xff] %v690
        %809 = vst [vmem:[%s165 + $0xb0] sm:$0xff] %v777
        %810 = vst [vmem:[%s165 + $0xb8] sm:$0xff] %v779
        %811 = vst [vmem:[%s165 + $0xc0] sm:$0xff] %v516
        %812 = vst [vmem:[%s165 + $0xc8] sm:$0xff] %v518
        %813 = vst [vmem:[%s165 + $0xd0] sm:$0xff] %v605
        %814 = vst [vmem:[%s165 + $0xd8] sm:$0xff] %v607
        %815 = vst [vmem:[%s165 + $0xe0] sm:$0xff] %v694
        %816 = vst [vmem:[%s165 + $0xe8] sm:$0xff] %v696
        %817 = vst [vmem:[%s165 + $0xf0] sm:$0xff] %v783
        %818 = vst [vmem:[%s165 + $0xf8] sm:$0xff] %v785
        %s819 = smul.u32 4, %s14
        %p820 = scmp.lt.s32.totalorder %s819, 7
        %s821 = scalar_select %p820, %s819, 7
        %s822 = smul.addr %s821, 8
        %s823 = smul.addr %s822, 8
        %s824 = scalar_lea.vmem %s2, %s823
        // Predicated region
        $region33: #{basic_interpolate.1} parent=27 // pred_check
          %p825 = pneg %p79
        $region34: #{basic_interpolate.1} parent=27 // pred_check_branch
          %827 = sbr.rel (%p825) target = $region36
        $region35: #{basic_interpolate.1} parent=27 // pred_region
          %s828 = smul.u32 4, %s14
        $region36: #{basic_interpolate.1} parent=27 // pred_fallthru
          _
      $region28: #{basic_interpolate.1} parent=5 // pred_fallthru
        _
      %p829 = scmp.le.s32.totalorder 2, %s9
      // Predicated region
      $region37: #{basic_interpolate.1} parent=5 // pred_check
        %p830 = pneg %p829
      $region38: #{basic_interpolate.1} parent=5 // pred_check_branch
        %832 = sbr.rel (%p830) target = $region40
      $region39: #{basic_interpolate.1} parent=5 // pred_region
        %s833 = ssub.s32 %s9, 2
        // Predicated region
        $region41: #{basic_interpolate.1} parent=39 // pred_check
          %p834 = pneg %p85
        $region42: #{basic_interpolate.1} parent=39 // pred_check_branch
          %836 = sbr.rel (%p834) target = $region44
        $region43: #{basic_interpolate.1} parent=39 // pred_region
          %s837 = smul.u32 4, %s15
          %p838 = scmp.lt.s32.totalorder %s837, 7
          %s839 = scalar_select %p838, %s837, 7
          %s840 = smul.addr %s839, 8
          %s841 = smul.addr %s840, 8
          %s842 = scalar_lea.vmem %s2, %s841
        $region44: #{basic_interpolate.1} parent=39 // pred_fallthru
          _
      $region40: #{basic_interpolate.1} parent=5 // pred_fallthru
        _
    $region6: #{basic_interpolate.1} parent=1 // loop_footer
      %s13 = sadd.s32 1, %s9
    $region7: #{basic_interpolate.1} parent=1 // loop_footer_branch
      %8 = sbr.rel target = $region3
    $region8: #{basic_interpolate.1} parent=1 // loop_exit
      _
    %843 = vsyncpa [#allocation3], 1
    %s844 = scalar_lea.sflag [#allocation3], 1
    %845 = vsyncpa %s844, 1

</llo_original>
